<compile_context>
chip_gen: v7x
topology: tpu7x:2x2x1
jax: 0.10.0
libtpu: 0.0.40
codegen_flags: <defaults>
</compile_context>

<pallas_src>
import functools
import math

import jax
import jax.numpy as jnp
from jax.experimental import pallas as pl
from jax.experimental.pallas import tpu as pltpu

BN_EPS = 1e-5


def _blend_linear_kernel(xaug_ref, w_ref, gb_ref, o_ref, *, inv_batch: float):
    # One fused MXU matmul: x_aug @ [W0^T; (W1-W0)^T; b0; b1-b0]
    #   = y0 + t * (y1 - y0)                       (blend + biases folded in)
    out = jnp.dot(xaug_ref[...], w_ref[...],
                  preferred_element_type=jnp.float32)            # [B, TN] f32

    # BatchNorm1d (training mode): two-pass batch stats — the batch axis is
    # never tiled, so the per-feature statistics are exact.
    mean = jnp.sum(out, axis=0, keepdims=True) * inv_batch       # [1, TN]
    centered = out - mean
    var = jnp.sum(centered * centered, axis=0, keepdims=True) * inv_batch
    inv_std = jax.lax.rsqrt(var + BN_EPS)                        # EUP slot
    scale = inv_std * gb_ref[0:1, :]                             # inv_std * gamma
    # Folded affine: 2 VPU ops over the [B, TN] tensor.
    o_ref[...] = (centered * scale + gb_ref[1:2, :]).astype(o_ref.dtype)


def _pick_tn(d_out: int) -> int:
    """Lane-/MXU-aligned feature tile, gated per TPU generation."""
    if d_out <= 128:
        return 128
    try:
        kind = jax.devices()[0].device_kind.lower()
    except Exception:
        kind = ""
    # v2-v5 MXUs are 128-wide; only v6e/v7x (256x256 MXU) benefit from TN=256.
    small_mxu = any(v in kind for v in ("v2", "v3", "v4", "v5"))
    return 128 if small_mxu else 256


def prepare_blend_linear_params(w0, b0, w1, b1, gamma, beta,
                                compute_dtype=jnp.bfloat16):
    """One-time parameter prep (keep OUT of the per-step hot path).

    w0, w1: [D_out, D_in] (PyTorch nn.Linear layout); b*, gamma, beta: [D_out].
    """
    d_out, d_in = w0.shape
    tn = _pick_tn(d_out)
    n_tiles = pl.cdiv(d_out, tn)
    n_pad = n_tiles * tn

    k_aug = 2 * d_in + 2                    # [x | t*x | 1 | t]
    k_pad = ((k_aug + 7) // 8) * 8          # sublane-align the contraction dim

    f32 = jnp.float32
    w0t = jnp.transpose(w0).astype(f32)                             # [D_in, D_out]
    dwt = jnp.transpose(w1.astype(f32) - w0.astype(f32))            # [D_in, D_out]
    w_aug = jnp.concatenate(
        [w0t,
         dwt,
         b0.reshape(1, d_out).astype(f32),
         (b1.astype(f32) - b0.astype(f32)).reshape(1, d_out),
         jnp.zeros((k_pad - k_aug, d_out), f32)], axis=0)           # [K_pad, D_out]
    w_aug = jnp.pad(w_aug, ((0, 0), (0, n_pad - d_out)))            # [K_pad, N_pad]
    # Contiguous per-tile layout: tile j holds columns [j*TN, (j+1)*TN).
    w_tiles = (w_aug.reshape(k_pad, n_tiles, tn)
               .transpose(1, 0, 2)
               .astype(compute_dtype))                              # [n_tiles, K_pad, TN]

    gb = jnp.stack([jnp.pad(gamma.astype(f32), (0, n_pad - d_out)),
                    jnp.pad(beta.astype(f32), (0, n_pad - d_out))],
                   axis=0)                                          # [2, N_pad] f32

    return dict(w_tiles=w_tiles, gb=gb,
                d_in=d_in, d_out=d_out, n_pad=n_pad, tn=tn,
                k_aug=k_aug, k_pad=k_pad, compute_dtype=compute_dtype)


def blend_linear(t, x, params):
    """t: [B], x: [B, D_in].  Returns [B, D_out] float32 (training-mode BN)."""
    B, d_in = x.shape
    assert d_in == params["d_in"]
    d_out, tn = params["d_out"], params["tn"]
    k_aug, k_pad = params["k_aug"], params["k_pad"]
    n_tiles = params["n_pad"] // tn
    cdtype = params["compute_dtype"]

    # Augmented activation (built once per call; stays resident in VMEM across
    # the feature grid).  t*x / 1 / t columns fold blend + bias into the matmul.
    xf = x.astype(jnp.float32)
    t2 = t.reshape(B, 1).astype(jnp.float32)
    x_aug = jnp.concatenate(
        [xf, xf * t2,
         jnp.ones((B, 1), jnp.float32), t2,
         jnp.zeros((B, k_pad - k_aug), jnp.float32)], axis=-1).astype(cdtype)

    kernel = functools.partial(_blend_linear_kernel, inv_batch=1.0 / B)

    itemsize = jnp.dtype(cdtype).itemsize
    # VMEM budget from actual buffer sizes (resident x_aug double-buffered by
    # the default pipeliner, + W / gamma-beta / out tiles double-buffered, +
    # f32 epilogue temporaries), 2x margin, capped for v7x's 64 MiB VMEM.
    needed = (2 * B * k_pad * itemsize          # x_aug
              + 2 * k_pad * tn * itemsize       # fused weight tile
              + 2 * 2 * tn * 4                  # gamma/beta tile
              + 2 * B * tn * 4                  # output tile
              + 4 * B * tn * 4)                 # epilogue temporaries
    vmem_limit = int(min(max(2 * needed, 8 << 20), 40 << 20))

    cost = pl.CostEstimate(
        flops=int(2 * B * k_pad * n_tiles * tn + 6 * B * n_tiles * tn),
        transcendentals=int(n_tiles * tn),
        bytes_accessed=int(itemsize * B * k_pad
                           + itemsize * k_pad * n_tiles * tn
                           + 4 * 2 * n_tiles * tn
                           + 4 * B * d_out),
    )

    return pl.pallas_call(
        kernel,
        out_shape=jax.ShapeDtypeStruct((B, d_out), jnp.float32),
        grid_spec=pltpu.PrefetchScalarGridSpec(
            num_scalar_prefetch=0,
            grid=(n_tiles,),
            in_specs=[
                # x_aug: resident across the feature grid.
                pl.BlockSpec((B, k_pad), lambda j: (0, 0)),
                # Fused weight tile, stored contiguously per tile (leading dim
                # squeezed: kernel sees [K_pad, TN]).
                pl.BlockSpec((None, k_pad, tn), lambda j: (j, 0, 0)),
                # [gamma; beta] tile — one DMA instead of three tiny ones.
                pl.BlockSpec((2, tn), lambda j: (0, j)),
            ],
            out_specs=pl.BlockSpec((B, tn), lambda j: (0, j)),
        ),
        compiler_params=pltpu.CompilerParams(
            dimension_semantics=("parallel",),
            vmem_limit_bytes=vmem_limit,
        ),
        cost_estimate=cost,
    )(x_aug, params["w_tiles"], params["gb"])


def blend_linear_ref(t, x, w0, b0, w1, b1, gamma, beta,
                     matmul_dtype=jnp.float32):
    """Pure-JAX reference mirroring the PyTorch module (training-mode BN)."""
    xm = x.astype(matmul_dtype)
    y0 = jnp.dot(xm, jnp.transpose(w0).astype(matmul_dtype),
                 preferred_element_type=jnp.float32) + b0
    y1 = jnp.dot(xm, jnp.transpose(w1).astype(matmul_dtype),
                 preferred_element_type=jnp.float32) + b1
    out = y0 + (y1 - y0) * t[:, None]
    mean = out.mean(axis=0, keepdims=True)
    var = ((out - mean) ** 2).mean(axis=0, keepdims=True)
    return (out - mean) / jnp.sqrt(var + BN_EPS) * gamma + beta


def _make_inputs(key, B, d_in, d_out):
    k_t, k_x, k_w0, k_b0, k_w1, k_b1, k_g, k_bt = jax.random.split(key, 8)
    t = jax.random.uniform(k_t, (B,), dtype=jnp.float32)
    x = jax.random.normal(k_x, (B, d_in), dtype=jnp.float32)
    bound = 1.0 / math.sqrt(d_in)
    w0 = jax.random.uniform(k_w0, (d_out, d_in), minval=-bound, maxval=bound,
                            dtype=jnp.float32)
    b0 = jax.random.uniform(k_b0, (d_out,), minval=-bound, maxval=bound,
                            dtype=jnp.float32)
    w1 = jax.random.uniform(k_w1, (d_out, d_in), minval=-bound, maxval=bound,
                            dtype=jnp.float32)
    b1 = jax.random.uniform(k_b1, (d_out,), minval=-bound, maxval=bound,
                            dtype=jnp.float32)
    # Non-trivial affine so the folded BN scale/shift path is exercised.
    gamma = 1.0 + 0.1 * jax.random.normal(k_g, (d_out,), dtype=jnp.float32)
    beta = 0.1 * jax.random.normal(k_bt, (d_out,), dtype=jnp.float32)
    return t, x, w0, b0, w1, b1, gamma, beta


def _run_case(key, B, d_in, d_out, compute_dtype, atol, rtol):
    t, x, w0, b0, w1, b1, gamma, beta = _make_inputs(key, B, d_in, d_out)
    params = prepare_blend_linear_params(w0, b0, w1, b1, gamma, beta,
                                         compute_dtype=compute_dtype)
    out = jax.block_until_ready(blend_linear(t, x, params))
    assert out.shape == (B, d_out)
    ref = blend_linear_ref(t, x, w0, b0, w1, b1, gamma, beta,
                           matmul_dtype=jnp.float32)
    assert jnp.allclose(out, ref, atol=atol, rtol=rtol), (
        f"mismatch (dtype={compute_dtype}, d_out={d_out}): "
        f"max_abs_err={float(jnp.max(jnp.abs(out - ref)))}")


if __name__ == "__main__":
    key = jax.random.PRNGKey(0)
    k1, k2, k3 = jax.random.split(key, 3)

    # f32 MXU path: exact parity with the PyTorch-style f32 reference.
    _run_case(k1, B=8, d_in=32, d_out=32, compute_dtype=jnp.float32,
              atol=1e-4, rtol=1e-4)

    # bf16 MXU path (performance default): coarse check vs the f32 reference
    # (bf16 operand rounding amplified by the BN normalization).
    _run_case(k2, B=8, d_in=32, d_out=32, compute_dtype=jnp.bfloat16,
              atol=5e-2, rtol=5e-2)

    # Multi-tile / partial-final-tile path (d_out not a multiple of TN).
    _run_case(k3, B=8, d_in=32, d_out=192, compute_dtype=jnp.float32,
              atol=1e-4, rtol=1e-4)

    print("KERNEL_OK")
</pallas_src>

<mosaic_0001>
module attributes {stable_mosaic.version = 11 : i64} {
  func.func @_blend_linear_kernel(%arg0: i32, %arg1: memref<8x72xf32, #tpu.memory_space<vmem>>, %arg2: memref<1x72x128xf32, #tpu.memory_space<vmem>>, %arg3: memref<2x128xf32, #tpu.memory_space<vmem>>, %arg4: memref<8x128xf32, #tpu.memory_space<vmem>>) attributes {dimension_semantics = [#tpu.dimension_semantics<parallel>], iteration_bounds = array<i64: 1>, scalar_prefetch = 0 : i64, scratch_operands = 0 : i64, tpu.core_type = #tpu.core_type<tc>, window_params = [{pipeline_mode = #tpu.pipeline_mode<synchronous>, transform_indices = @transform_0, window_bounds = array<i64: 8, 72>}, {transform_indices = @transform_1, window_bounds = array<i64: 1, 72, 128>}, {transform_indices = @transform_2, window_bounds = array<i64: 2, 128>}, {transform_indices = @transform_3, window_bounds = array<i64: 8, 128>}]} {
    %c0 = arith.constant 0 : index
    %c0_0 = arith.constant 0 : index
    %0 = vector.load %arg1[%c0, %c0_0] : memref<8x72xf32, #tpu.memory_space<vmem>>, vector<8x72xf32>
    %c0_1 = arith.constant 0 : index
    %c0_2 = arith.constant 0 : index
    %c0_3 = arith.constant 0 : index
    %1 = vector.load %arg2[%c0_1, %c0_2, %c0_3] : memref<1x72x128xf32, #tpu.memory_space<vmem>>, vector<1x72x128xf32>
    %2 = vector.shape_cast %1 : vector<1x72x128xf32> to vector<72x128xf32>
    %cst = arith.constant dense<0.000000e+00> : vector<8x128xf32>
    %3 = tpu.matmul %0, %2, %cst {dimension_numbers = #tpu.dot_dimension_numbers<[1], [0], [0], [1], [0, 0, 1, 1], [], []>} : vector<8x72xf32>, vector<72x128xf32>, vector<8x128xf32> -> vector<8x128xf32>
    %cst_4 = arith.constant dense<0.000000e+00> : vector<128xf32>
    %4 = vector.multi_reduction <add>, %3, %cst_4 [0] : vector<8x128xf32> to vector<128xf32>
    %5 = vector.shape_cast %4 : vector<128xf32> to vector<1x128xf32>
    %cst_5 = arith.constant 1.250000e-01 : f32
    %6 = vector.broadcast %cst_5 : f32 to vector<1x128xf32>
    %7 = arith.mulf %5, %6 : vector<1x128xf32>
    %8 = vector.broadcast %7 : vector<1x128xf32> to vector<8x128xf32>
    %9 = arith.subf %3, %8 : vector<8x128xf32>
    %10 = arith.mulf %9, %9 : vector<8x128xf32>
    %cst_6 = arith.constant dense<0.000000e+00> : vector<128xf32>
    %11 = vector.multi_reduction <add>, %10, %cst_6 [0] : vector<8x128xf32> to vector<128xf32>
    %12 = vector.shape_cast %11 : vector<128xf32> to vector<1x128xf32>
    %cst_7 = arith.constant 1.250000e-01 : f32
    %13 = vector.broadcast %cst_7 : f32 to vector<1x128xf32>
    %14 = arith.mulf %12, %13 : vector<1x128xf32>
    %cst_8 = arith.constant 9.99999974E-6 : f32
    %15 = vector.broadcast %cst_8 : f32 to vector<1x128xf32>
    %16 = arith.addf %14, %15 : vector<1x128xf32>
    %17 = math.rsqrt %16 : vector<1x128xf32>
    %c0_9 = arith.constant 0 : index
    %c0_10 = arith.constant 0 : index
    %18 = vector.load %arg3[%c0_9, %c0_10] : memref<2x128xf32, #tpu.memory_space<vmem>>, vector<1x128xf32>
    %19 = arith.mulf %17, %18 : vector<1x128xf32>
    %20 = vector.broadcast %19 : vector<1x128xf32> to vector<8x128xf32>
    %21 = arith.mulf %9, %20 : vector<8x128xf32>
    %c1 = arith.constant 1 : index
    %c0_11 = arith.constant 0 : index
    %22 = vector.load %arg3[%c1, %c0_11] : memref<2x128xf32, #tpu.memory_space<vmem>>, vector<1x128xf32>
    %23 = vector.broadcast %22 : vector<1x128xf32> to vector<8x128xf32>
    %24 = arith.addf %21, %23 : vector<8x128xf32>
    %c0_12 = arith.constant 0 : index
    %c0_13 = arith.constant 0 : index
    %25 = vector.load %arg4[%c0_12, %c0_13] : memref<8x128xf32, #tpu.memory_space<vmem>>, vector<8x128xf32>
    tpu.vector_store %arg4[%c0_12, %c0_13], %24 {strides = array<i32>} : memref<8x128xf32, #tpu.memory_space<vmem>>, vector<8x128xf32>,
    return
  }
  func.func @transform_0(%arg0: i32) -> (i32, i32) {
    %c0_i32 = arith.constant 0 : i32
    %c0_i32_0 = arith.constant 0 : i32
    %c0_i32_1 = arith.constant 0 : i32
    return %c0_i32, %c0_i32_0 : i32, i32
  }
  func.func @transform_1(%arg0: i32) -> (i32, i32, i32) {
    %c0_i32 = arith.constant 0 : i32
    %c0_i32_0 = arith.constant 0 : i32
    %c0_i32_1 = arith.constant 0 : i32
    return %arg0, %c0_i32, %c0_i32_0 : i32, i32, i32
  }
  func.func @transform_2(%arg0: i32) -> (i32, i32) {
    %c0_i32 = arith.constant 0 : i32
    %c0_i32_0 = arith.constant 0 : i32
    return %c0_i32, %arg0 : i32, i32
  }
  func.func @transform_3(%arg0: i32) -> (i32, i32) {
    %c0_i32 = arith.constant 0 : i32
    %c0_i32_0 = arith.constant 0 : i32
    return %c0_i32, %arg0 : i32, i32
  }
}

</mosaic_0001>

<llo_original>
// kernel: tpu_custom_call.1
$region0: #{tpu_custom_call.1}
  #allocation0 [shape = 'u32[]', space=smem, size = 0x4, offset = 0x4, fixed_abs, tag = 'smem constant byte address 0x4 - core index']
  #allocation1 [shape = 'u32[144,128]{1,0:T(1,128)}', space=vmem, size = 0x12000, scoped, tag = 'internal scratch']
  %s0 = inlined_call_operand.hbm [shape: f32[8,72], index: 0, kind: input, shape index: {}]
  %s1 = inlined_call_operand.hbm [shape: f32[1,72,128], index: 1, kind: input, shape index: {}]
  %s2 = inlined_call_operand.vmem [shape: f32[2,128], index: 2, kind: input, shape index: {}]
  %s3 = inlined_call_operand.hbm [shape: f32[8,32], index: 3, kind: output, shape index: {}]
  %s4 = sld [smem:[#allocation0]]
  $region30: #{tpu_custom_call.1} parent=0
    _
  %s6 = ssub.s32 1, %s4
  %s7 = scalar_select 0, %s6, %s4
  $region1: #{tpu_custom_call.1} parent=0
    #allocation2 [shape = 'u8[4096]{0}', space=vmem, size = 0x1000, scoped, tag = 'input window, operand 0, single buffered']
    #allocation3 [shape = 's32[1]{0}', space=sflag, size = 0x4, scoped, tag = 'scoped memory for tpu_custom_call.1']
    #allocation4 [shape = 's32[1]{0}', space=sflag, size = 0x4, scoped, tag = 'scoped memory for tpu_custom_call.1']
    #allocation5 [shape = 'u8[36864]{0}', space=vmem, size = 0x9000, scoped, tag = 'input window, operand 1, single buffered']
    #allocation6 [shape = 's32[1]{0}', space=sflag, size = 0x4, scoped, tag = 'scoped memory for tpu_custom_call.1']
    #allocation7 [shape = 'u8[4096]{0}', space=vmem, size = 0x1000, scoped, tag = 'output window, operand 0, single buffered']
    %8 = vsyncpa [#allocation3], 0
    %9 = vsyncpa [#allocation6], 0
    %10 = vsyncpa [#allocation4], 0
    // Predicated region
    $region2: #{tpu_custom_call.1} parent=1 // pred_check
      _
    $region3: #{tpu_custom_call.1} parent=1 // pred_check_branch
      %12 = sbr.rel (0) target = $region5
    $region4: #{tpu_custom_call.1} parent=1 // pred_region
      %s14 = ssub.s32 128, 128
      %15 = vsyncadd [#allocation3], %s14
      %s17 = sshll.u32 [#allocation2], 4
      %s18 = int_to_ptr.vmem [resolvable:$true] %s17
      %20 = dma.hbm_to_vmem [thread:$0]  %s0, 128, %s18, [#allocation3]
    $region5: #{tpu_custom_call.1} parent=1 // pred_fallthru
      _
    // Predicated region
    $region6: #{tpu_custom_call.1} parent=1 // pred_check
      _
    $region7: #{tpu_custom_call.1} parent=1 // pred_check_branch
      %22 = sbr.rel (0) target = $region9
    $region8: #{tpu_custom_call.1} parent=1 // pred_region
      %s24 = ssub.s32 1152, 1152
      %25 = vsyncadd [#allocation6], %s24
      %s26 = sshll.u32 [#allocation5], 4
      %s27 = int_to_ptr.vmem [resolvable:$true] %s26
      %32 = dma.hbm_to_vmem [thread:$0]  %s1, 1152, %s27, [#allocation6], 128, 128, 8
    $region9: #{tpu_custom_call.1} parent=1 // pred_fallthru
      _
    // Predicated region
    $region10: #{tpu_custom_call.1} parent=1 // pred_check
      _
    $region11: #{tpu_custom_call.1} parent=1 // pred_check_branch
      %34 = sbr.rel (0) target = $region13
    $region12: #{tpu_custom_call.1} parent=1 // pred_region
      _
    $region13: #{tpu_custom_call.1} parent=1 // pred_fallthru
      _
    // Predicated region
    $region14: #{tpu_custom_call.1} parent=1 // pred_check
      _
    $region15: #{tpu_custom_call.1} parent=1 // pred_check_branch
      %36 = sbr.rel (0) target = $region17
    $region16: #{tpu_custom_call.1} parent=1 // pred_region
      %37 = dma.done [#allocation3], 128
    $region17: #{tpu_custom_call.1} parent=1 // pred_fallthru
      _
    // Predicated region
    $region18: #{tpu_custom_call.1} parent=1 // pred_check
      _
    $region19: #{tpu_custom_call.1} parent=1 // pred_check_branch
      %39 = sbr.rel (0) target = $region21
    $region20: #{tpu_custom_call.1} parent=1 // pred_region
      %40 = dma.done [#allocation6], 1152
    $region21: #{tpu_custom_call.1} parent=1 // pred_fallthru
      _
    %v41 = vld [vmem:[#allocation2] sm:$0xff]
    %v42 = vld [vmem:[#allocation5] sm:$0xff]
    %v43 = vld [vmem:[#allocation5 + $0x8] sm:$0xff]
    %v44 = vld [vmem:[#allocation5 + $0x10] sm:$0xff]
    %v45 = vld [vmem:[#allocation5 + $0x18] sm:$0xff]
    %v46 = vld [vmem:[#allocation5 + $0x20] sm:$0xff]
    %v47 = vld [vmem:[#allocation5 + $0x28] sm:$0xff]
    %v48 = vld [vmem:[#allocation5 + $0x30] sm:$0xff]
    %v49 = vld [vmem:[#allocation5 + $0x38] sm:$0xff]
    %v50 = vld [vmem:[#allocation5 + $0x40] sm:$0xff]
    %vm51 = vcmask 588800
    %v53 = vsel %vm51, %v41, 0
    %55 = vmatprep.subr.mxu0 0.0
    %56 = vmatpush1.msra.mxu0 %v42
    %57 = vmatprep.subr.mxu0 0.0
    %58 = vmatpush1.msra.mxu0 %v43
    %59 = vmatprep.subr.mxu0 0.0
    %60 = vmatpush1.msra.mxu0 %v44
    %61 = vmatprep.subr.mxu0 0.0
    %62 = vmatpush1.msra.mxu0 %v45
    %63 = vmatprep.subr.mxu0 0.0
    %64 = vmatpush1.msra.mxu0 %v46
    %65 = vmatprep.subr.mxu0 0.0
    %66 = vmatpush1.msra.mxu0 %v47
    %67 = vmatprep.subr.mxu0 0.0
    %68 = vmatpush1.msra.mxu0 %v48
    %69 = vmatprep.subr.mxu0 0.0
    %70 = vmatpush1.msra.mxu0 %v49
    %71 = vmatprep.subr.mxu0 0.0
    %72 = vmatpush1.msra.mxu0 %v50
    %73 = vmatprep.subr.mxu0 0.0
    %74 = vmatpush1.msra.mxu0 0.0
    %75 = vmatprep.subr.mxu0 0.0
    %76 = vmatpush1.msra.mxu0 0.0
    %77 = vmatprep.subr.mxu0 0.0
    %78 = vmatpush1.msra.mxu0 0.0
    %79 = vmatprep.subr.mxu0 0.0
    %80 = vmatpush1.msra.mxu0 0.0
    %81 = vmatprep.subr.mxu0 0.0
    %82 = vmatpush1.msra.mxu0 0.0
    %83 = vmatprep.subr.mxu0 0.0
    %84 = vmatpush1.msra.mxu0 0.0
    %85 = vmatprep.subr.mxu0 0.0
    %86 = vmatpush1.msra.mxu0 0.0
    %87 = vmatprep.subr.mxu0 0.0
    %88 = vmatpush1.msra.mxu0 0.0
    %89 = vmatprep.subr.mxu0 0.0
    %90 = vmatpush1.msra.mxu0 0.0
    %91 = vmatprep.subr.mxu0 0.0
    %92 = vmatpush1.msra.mxu0 0.0
    %93 = vmatprep.subr.mxu0 0.0
    %94 = vmatpush1.msra.mxu0 0.0
    %95 = vmatprep.subr.mxu0 0.0
    %96 = vmatpush1.msra.mxu0 0.0
    %97 = vmatprep.subr.mxu0 0.0
    %98 = vmatpush1.msra.mxu0 0.0
    %99 = vmatprep.subr.mxu0 0.0
    %100 = vmatpush1.msra.mxu0 0.0
    %101 = vmatprep.subr.mxu0 0.0
    %102 = vmatpush1.msra.mxu0 0.0
    %103 = vmatprep.subr.mxu0 0.0
    %104 = vmatpush1.msra.mxu0 0.0
    %105 = vmatprep.subr.mxu0 0.0
    %106 = vmatpush1.msra.mxu0 0.0
    %107 = vmatprep.subr.mxu0 0.0
    %108 = vmatpush1.msra.mxu0 0.0
    %109 = vmatprep.subr.mxu0 0.0
    %110 = vmatpush1.msra.mxu0 0.0
    %111 = vmatprep.subr.mxu0 0.0
    %112 = vmatpush1.msra.mxu0 0.0
    %113 = vmatprep.subr.mxu0 0.0
    %114 = vmatpush1.msra.mxu0 0.0
    %115 = vmatprep.subr.mxu0 0.0
    %116 = vmatpush1.msra.mxu0 0.0
    %117 = vmatprep.subr.mxu0 0.0
    %118 = vmatpush1.msra.mxu0 0.0
    %119 = vmatprep.mubr.f32.mxu0 0.0
    %120 = vmatmul.mubr.f32.gmra.mrb[0].mxu0 %v53
    %v121 = vpop.f32.mrb[0].mxu0
    %v122 = vadd.f32 0.0, %v121
    %v123 = vpop.f32.mrb[0].mxu0
    %124 = vdwg.mxu0
    %v125 = vrot.slane %v122, 4
    %v126 = vadd.f32 %v122, %v125
    %v127 = vrot.slane %v126, 2
    %v128 = vadd.f32 %v126, %v127
    %v129 = vrot.slane %v128, 1
    %v130 = vadd.f32 %v128, %v129
    %v131 = vmul.f32 %v130, 0.125
    %v132 = vsub.f32 %v122, %v131
    %v133 = vmul.f32 %v132, %v132
    %v134 = vrot.slane %v133, 4
    %v135 = vadd.f32 %v133, %v134
    %v136 = vrot.slane %v135, 2
    %v137 = vadd.f32 %v135, %v136
    %v138 = vrot.slane %v137, 1
    %v139 = vadd.f32 %v137, %v138
    %v140 = vmul.f32 %v139, 0.125
    %v141 = vadd.f32 %v140, 1e-05
    %v142 = vrsqrt.pop %v141
    %v143 = vld [vmem:[%s2] sm:$0x1]
    %v144 = vmul.f32 %v142, %v143
    %v145 = vlaneseq
    %v146 = vshrl.u32 %v145, 7
    %v147 = vsub.s32 0, %v146
    %v148 = vrot.slane %v144, %v147
    %v149 = vmul.f32 %v132, %v148
    %v150 = vld [vmem:[%s2 + $0x1] sm:$0x1]
    %v151 = vlaneseq
    %v152 = vshrl.u32 %v151, 7
    %v153 = vsub.s32 0, %v152
    %v154 = vrot.slane %v150, %v153
    %v155 = vadd.f32 %v149, %v154
    %156 = vst [vmem:[#allocation7] sm:$0xff] %v155
    // Predicated region
    $region22: #{tpu_custom_call.1} parent=1 // pred_check
      _
    $region23: #{tpu_custom_call.1} parent=1 // pred_check_branch
      %158 = sbr.rel (0) target = $region25
    $region24: #{tpu_custom_call.1} parent=1 // pred_region
      %s160 = ssub.s32 128, 128
      %161 = vsyncadd [#allocation4], %s160
      %s163 = sshll.u32 [#allocation7], 4
      %s164 = int_to_ptr.vmem [resolvable:$true] %s163
      %166 = dma.vmem_to_hbm [thread:$0]  %s164, 128, %s3, [#allocation4]
    $region25: #{tpu_custom_call.1} parent=1 // pred_fallthru
      _
    // Predicated region
    $region26: #{tpu_custom_call.1} parent=1 // pred_check
      _
    $region27: #{tpu_custom_call.1} parent=1 // pred_check_branch
      %168 = sbr.rel (0) target = $region29
    $region28: #{tpu_custom_call.1} parent=1 // pred_region
      %169 = dma.done [#allocation4], 128
    $region29: #{tpu_custom_call.1} parent=1 // pred_fallthru
      _
    %170 = vsyncpa [#allocation3], 1
    %171 = vsyncpa [#allocation6], 1
    %172 = vsyncpa [#allocation4], 1

</llo_original>
